<compile_context>
chip_gen: v7x
topology: tpu7x:2x2x1
jax: 0.10.0
libtpu: 0.0.40
codegen_flags: <defaults>
</compile_context>

<pallas_src>
import functools

import jax
import jax.numpy as jnp
from jax.experimental import pallas as pl
from jax.experimental.pallas import tpu as pltpu


def _critic_kernel(x_ref, a_ref, *refs, n_hidden, compute_dtype):
    """refs = (W0x, W0a, b0, [W_h, b_h] * n_hidden, w_out_col, b_out, out_ref).

    Activations are kept transposed (features, TB): batch on the lane axis.
    Weights are (out_features, in_features); biases are (out_features, 1)
    columns; w_out_col is (hidden_dim, 1) for the VPU/XLU output reduction.
    """
    out_ref = refs[-1]
    p = refs[:-1]

    xt = x_ref[...].astype(compute_dtype)      # (TB, d_xg)
    at = a_ref[...].astype(compute_dtype)      # (TB, d_act)

    # Layer 1: concat + 1/max_action already folded into (W0x, W0a).
    # Contract on the feature axis of both operands -> (first_dim, TB).
    dn = (((1,), (1,)), ((), ()))
    w0x, w0a, b0 = p[0], p[1], p[2]
    h = jax.lax.dot_general(w0x[...], xt, dn, preferred_element_type=jnp.float32)
    h = h + jax.lax.dot_general(w0a[...], at, dn,
                                preferred_element_type=jnp.float32)
    h = jnp.maximum(h + b0[...], 0.0)

    # Hidden layers (resident weights already in compute_dtype; f32 accumulate).
    idx = 3
    for _ in range(n_hidden):
        w, b = p[idx], p[idx + 1]
        idx += 2
        h = jnp.dot(w[...], h.astype(compute_dtype),
                    preferred_element_type=jnp.float32)
        h = jnp.maximum(h + b[...], 0.0)

    # Output layer on VPU + XLU: (H,1) * (H,TB) -> sublane-sum -> (1,TB).
    w_out, b_out = p[idx], p[idx + 1]
    out_ref[...] = jnp.sum(h * w_out[...], axis=0, keepdims=True) + b_out[...]


def _default_block_b(batch):
    """Large lane-aligned tiles; keep >= 2 grid steps for big batches (v7x)."""
    lane = 128
    b_aligned = pl.cdiv(batch, lane) * lane
    if b_aligned <= 512:
        return b_aligned                       # small batch: a single tile
    half = pl.cdiv(pl.cdiv(batch, 2), lane) * lane
    return max(512, min(4096, half))


def critic_forward(x, actions, params, max_action, n_hidden, *,
                   block_b=None, compute_dtype=jnp.float32):
    """x: (B, obs+goal), actions: (B, action). Returns q_value: (B, 1)."""
    B, d_xg = x.shape
    d_act = actions.shape[1]

    x = x.astype(jnp.float32)
    actions = actions.astype(jnp.float32)

    # Fold the static 1/max_action scaling into W0's action columns and split
    # W0 so the kernel consumes x / actions without a concat.  MXU-operand
    # weights are pre-cast to compute_dtype here so resident weights are never
    # re-cast per grid step.  All of these are weight-sized (tiny) ops.
    w0, b0 = params[0], params[1]
    w0x = w0[:, :d_xg].astype(compute_dtype)
    w0a = (w0[:, d_xg:] * (1.0 / float(max_action))).astype(compute_dtype)

    kparams = [w0x, w0a, b0.astype(jnp.float32)]
    idx = 2
    for _ in range(n_hidden):
        w, b = params[idx], params[idx + 1]
        idx += 2
        kparams += [w.astype(compute_dtype), b.astype(jnp.float32)]
    w_out, b_out = params[idx], params[idx + 1]
    # Output layer runs on the VPU/XLU -> keep it f32, stored as a column.
    kparams += [w_out.astype(jnp.float32).reshape(-1, 1),
                b_out.astype(jnp.float32).reshape(1, 1)]

    if block_b is None:
        block_b = _default_block_b(B)
    n_tiles = pl.cdiv(B, block_b)

    # Batch tiles stream per grid step (uneven final tile handled by Pallas:
    # OOB reads are per-column garbage that only reaches discarded outputs);
    # weights/biases use a constant index_map so they stay VMEM-resident.
    in_specs = [pl.BlockSpec((block_b, d_xg), lambda i: (i, 0)),
                pl.BlockSpec((block_b, d_act), lambda i: (i, 0))]
    in_specs += [pl.BlockSpec(tuple(p.shape), lambda i: (0, 0)) for p in kparams]
    out_spec = pl.BlockSpec((1, block_b), lambda i: (0, i))

    # Advisory cost estimate: batch inputs + lane-dense output streamed once,
    # weights counted once (resident).
    flops = 2 * B * sum(int(params[k].shape[0]) * int(params[k].shape[1])
                        for k in range(0, len(params), 2))
    bytes_accessed = (int(x.size) * 4 + int(actions.size) * 4 + B * 4
                      + sum(int(p.size) * p.dtype.itemsize for p in kparams))
    cost = pl.CostEstimate(flops=int(flops), transcendentals=0,
                           bytes_accessed=int(bytes_accessed))

    kernel = functools.partial(_critic_kernel, n_hidden=n_hidden,
                               compute_dtype=compute_dtype)

    out = pl.pallas_call(
        kernel,
        grid=(n_tiles,),
        in_specs=in_specs,
        out_specs=out_spec,
        out_shape=jax.ShapeDtypeStruct((1, B), jnp.float32),
        compiler_params=pltpu.CompilerParams(
            dimension_semantics=("parallel",),
        ),
        cost_estimate=cost,
        # NOTE: if xprof ever shows exposed DMA on the streamed batch tiles,
        # pipeline_mode=pl.Buffered(3) on the two batch BlockSpecs is a cheap
        # knob; at these tile sizes default double-buffering already hides it.
    )(x, actions, *kparams)

    # Lane-dense (1, B) row -> (B, 1) column outside the kernel (free reshape).
    return out.reshape(B, 1)


def init_params(key, d_in, first_dim, hidden_dim, n_hidden):
    """PyTorch nn.Linear-style uniform(-1/sqrt(fan_in), 1/sqrt(fan_in)) init.

    Weights are (out_features, in_features); biases are (out_features, 1).
    """
    def linear(key, fan_in, fan_out):
        kw, kb = jax.random.split(key)
        bound = 1.0 / jnp.sqrt(float(fan_in))
        w = jax.random.uniform(kw, (fan_out, fan_in), jnp.float32, -bound, bound)
        b = jax.random.uniform(kb, (fan_out, 1), jnp.float32, -bound, bound)
        return w, b

    keys = jax.random.split(key, n_hidden + 2)
    params = []

    w, b = linear(keys[0], d_in, first_dim)
    params += [w, b]

    in_dim = first_dim
    for i in range(n_hidden):
        w, b = linear(keys[1 + i], in_dim, hidden_dim)
        params += [w, b]
        in_dim = hidden_dim

    w, b = linear(keys[-1], in_dim, 1)
    params += [w, b]
    return params


def reference_forward(x, actions, params, max_action, n_hidden):
    """Plain-JAX reference (mirrors the PyTorch forward)."""
    h = jnp.concatenate([x, actions / max_action], axis=1)
    w0, b0 = params[0], params[1]
    h = jax.nn.relu(h @ w0.T + b0.T)
    idx = 2
    for _ in range(n_hidden):
        w, b = params[idx], params[idx + 1]
        idx += 2
        h = jax.nn.relu(h @ w.T + b.T)
    w_out, b_out = params[idx], params[idx + 1]
    return h @ w_out.T + b_out.T


if __name__ == "__main__":
    # env_params: obs=8, goal=3, action=4, action_max=2.0
    # args: network_class='MLP', n_hidden=2, hidden_dim=32, first_dim=32
    OBS, GOAL, ACT = 8, 3, 4
    FIRST_DIM, HIDDEN_DIM, N_HIDDEN = 32, 32, 2
    MAX_ACTION = 2.0
    D_IN = OBS + GOAL + ACT

    key = jax.random.PRNGKey(0)
    k_p, k_small, k_big = jax.random.split(key, 3)
    params = init_params(k_p, D_IN, FIRST_DIM, HIDDEN_DIM, N_HIDDEN)

    # --- small batch (B=2): single tile, default f32 path -------------------
    B = 2
    kx, ka = jax.random.split(k_small)
    x = jax.random.normal(kx, (B, OBS + GOAL), jnp.float32)
    actions = jax.random.normal(ka, (B, ACT), jnp.float32) * MAX_ACTION

    q = jax.block_until_ready(
        critic_forward(x, actions, params, MAX_ACTION, N_HIDDEN))
    q_ref = reference_forward(x, actions, params, MAX_ACTION, N_HIDDEN)
    assert q.shape == (B, 1)
    assert jnp.allclose(q, q_ref, atol=1e-5, rtol=1e-5), (q, q_ref)

    # --- larger batch not divisible by the tile: multi-step grid + uneven
    # final tile (exercises OOB masking and the pipelined path) --------------
    B2 = 1000
    kx2, ka2 = jax.random.split(k_big)
    x2 = jax.random.normal(kx2, (B2, OBS + GOAL), jnp.float32)
    a2 = jax.random.normal(ka2, (B2, ACT), jnp.float32) * MAX_ACTION

    q2 = jax.block_until_ready(
        critic_forward(x2, a2, params, MAX_ACTION, N_HIDDEN, block_b=256))
    q2_ref = reference_forward(x2, a2, params, MAX_ACTION, N_HIDDEN)
    assert q2.shape == (B2, 1)
    assert jnp.allclose(q2, q2_ref, atol=1e-4, rtol=1e-4), (
        float(jnp.max(jnp.abs(q2 - q2_ref))))

    # Default (large-tile) block selection on the same batch.
    q2b = jax.block_until_ready(
        critic_forward(x2, a2, params, MAX_ACTION, N_HIDDEN))
    assert jnp.allclose(q2b, q2_ref, atol=1e-4, rtol=1e-4)

    # --- bf16 MXU-operand path (v6e/v7x-friendly); f32 accumulation + f32
    # bias/ReLU keep it close to the f32 reference ----------------------------
    q2_bf16 = jax.block_until_ready(
        critic_forward(x2, a2, params, MAX_ACTION, N_HIDDEN,
                       compute_dtype=jnp.bfloat16))
    assert jnp.allclose(q2_bf16, q2_ref, atol=1e-1, rtol=1e-1)

    print("KERNEL_OK")
</pallas_src>

<mosaic_0001>
module attributes {stable_mosaic.version = 11 : i64} {
  func.func @_critic_kernel(%arg0: i32, %arg1: memref<128x11xf32, #tpu.memory_space<vmem>>, %arg2: memref<128x4xf32, #tpu.memory_space<vmem>>, %arg3: memref<32x11xf32, #tpu.memory_space<vmem>>, %arg4: memref<32x4xf32, #tpu.memory_space<vmem>>, %arg5: memref<32x1xf32, #tpu.memory_space<vmem>>, %arg6: memref<32x32xf32, #tpu.memory_space<vmem>>, %arg7: memref<32x1xf32, #tpu.memory_space<vmem>>, %arg8: memref<32x32xf32, #tpu.memory_space<vmem>>, %arg9: memref<32x1xf32, #tpu.memory_space<vmem>>, %arg10: memref<32x1xf32, #tpu.memory_space<vmem>>, %arg11: memref<1x1xf32, #tpu.memory_space<vmem>>, %arg12: memref<1x128xf32, #tpu.memory_space<vmem>>) attributes {dimension_semantics = [#tpu.dimension_semantics<parallel>], iteration_bounds = array<i64: 1>, scalar_prefetch = 0 : i64, scratch_operands = 0 : i64, tpu.core_type = #tpu.core_type<tc>, window_params = [{transform_indices = @transform_0, window_bounds = array<i64: 128, 11>}, {transform_indices = @transform_1, window_bounds = array<i64: 128, 4>}, {pipeline_mode = #tpu.pipeline_mode<synchronous>, transform_indices = @transform_2, window_bounds = array<i64: 32, 11>}, {pipeline_mode = #tpu.pipeline_mode<synchronous>, transform_indices = @transform_3, window_bounds = array<i64: 32, 4>}, {pipeline_mode = #tpu.pipeline_mode<synchronous>, transform_indices = @transform_4, window_bounds = array<i64: 32, 1>}, {pipeline_mode = #tpu.pipeline_mode<synchronous>, transform_indices = @transform_5, window_bounds = array<i64: 32, 32>}, {pipeline_mode = #tpu.pipeline_mode<synchronous>, transform_indices = @transform_6, window_bounds = array<i64: 32, 1>}, {pipeline_mode = #tpu.pipeline_mode<synchronous>, transform_indices = @transform_7, window_bounds = array<i64: 32, 32>}, {pipeline_mode = #tpu.pipeline_mode<synchronous>, transform_indices = @transform_8, window_bounds = array<i64: 32, 1>}, {pipeline_mode = #tpu.pipeline_mode<synchronous>, transform_indices = @transform_9, window_bounds = array<i64: 32, 1>}, {pipeline_mode = #tpu.pipeline_mode<synchronous>, transform_indices = @transform_10, window_bounds = array<i64: 1, 1>}, {transform_indices = @transform_11, window_bounds = array<i64: 1, 128>}]} {
    %c0 = arith.constant 0 : index
    %c0_0 = arith.constant 0 : index
    %0 = vector.load %arg1[%c0, %c0_0] : memref<128x11xf32, #tpu.memory_space<vmem>>, vector<128x11xf32>
    %c0_1 = arith.constant 0 : index
    %c0_2 = arith.constant 0 : index
    %1 = vector.load %arg2[%c0_1, %c0_2] : memref<128x4xf32, #tpu.memory_space<vmem>>, vector<128x4xf32>
    %c0_3 = arith.constant 0 : index
    %c0_4 = arith.constant 0 : index
    %2 = vector.load %arg3[%c0_3, %c0_4] : memref<32x11xf32, #tpu.memory_space<vmem>>, vector<32x11xf32>
    %cst = arith.constant dense<0.000000e+00> : vector<32x128xf32>
    %3 = tpu.matmul %2, %0, %cst {dimension_numbers = #tpu.dot_dimension_numbers<[1], [1], [0], [0], [0, 0, 1, 0], [], []>} : vector<32x11xf32>, vector<128x11xf32>, vector<32x128xf32> -> vector<32x128xf32>
    %c0_5 = arith.constant 0 : index
    %c0_6 = arith.constant 0 : index
    %4 = vector.load %arg4[%c0_5, %c0_6] : memref<32x4xf32, #tpu.memory_space<vmem>>, vector<32x4xf32>
    %cst_7 = arith.constant dense<0.000000e+00> : vector<32x128xf32>
    %5 = tpu.matmul %4, %1, %cst_7 {dimension_numbers = #tpu.dot_dimension_numbers<[1], [1], [0], [0], [0, 0, 1, 0], [], []>} : vector<32x4xf32>, vector<128x4xf32>, vector<32x128xf32> -> vector<32x128xf32>
    %6 = arith.addf %3, %5 : vector<32x128xf32>
    %c0_8 = arith.constant 0 : index
    %c0_9 = arith.constant 0 : index
    %7 = vector.load %arg5[%c0_8, %c0_9] : memref<32x1xf32, #tpu.memory_space<vmem>>, vector<32x1xf32>
    %8 = vector.broadcast %7 : vector<32x1xf32> to vector<32x128xf32>
    %9 = arith.addf %6, %8 : vector<32x128xf32>
    %cst_10 = arith.constant 0.000000e+00 : f32
    %10 = vector.broadcast %cst_10 : f32 to vector<32x128xf32>
    %11 = arith.maximumf %9, %10 : vector<32x128xf32>
    %c0_11 = arith.constant 0 : index
    %c0_12 = arith.constant 0 : index
    %12 = vector.load %arg6[%c0_11, %c0_12] : memref<32x32xf32, #tpu.memory_space<vmem>>, vector<32x32xf32>
    %cst_13 = arith.constant dense<0.000000e+00> : vector<32x128xf32>
    %13 = tpu.matmul %12, %11, %cst_13 {dimension_numbers = #tpu.dot_dimension_numbers<[1], [0], [0], [1], [0, 0, 1, 1], [], []>} : vector<32x32xf32>, vector<32x128xf32>, vector<32x128xf32> -> vector<32x128xf32>
    %c0_14 = arith.constant 0 : index
    %c0_15 = arith.constant 0 : index
    %14 = vector.load %arg7[%c0_14, %c0_15] : memref<32x1xf32, #tpu.memory_space<vmem>>, vector<32x1xf32>
    %15 = vector.broadcast %14 : vector<32x1xf32> to vector<32x128xf32>
    %16 = arith.addf %13, %15 : vector<32x128xf32>
    %cst_16 = arith.constant 0.000000e+00 : f32
    %17 = vector.broadcast %cst_16 : f32 to vector<32x128xf32>
    %18 = arith.maximumf %16, %17 : vector<32x128xf32>
    %c0_17 = arith.constant 0 : index
    %c0_18 = arith.constant 0 : index
    %19 = vector.load %arg8[%c0_17, %c0_18] : memref<32x32xf32, #tpu.memory_space<vmem>>, vector<32x32xf32>
    %cst_19 = arith.constant dense<0.000000e+00> : vector<32x128xf32>
    %20 = tpu.matmul %19, %18, %cst_19 {dimension_numbers = #tpu.dot_dimension_numbers<[1], [0], [0], [1], [0, 0, 1, 1], [], []>} : vector<32x32xf32>, vector<32x128xf32>, vector<32x128xf32> -> vector<32x128xf32>
    %c0_20 = arith.constant 0 : index
    %c0_21 = arith.constant 0 : index
    %21 = vector.load %arg9[%c0_20, %c0_21] : memref<32x1xf32, #tpu.memory_space<vmem>>, vector<32x1xf32>
    %22 = vector.broadcast %21 : vector<32x1xf32> to vector<32x128xf32>
    %23 = arith.addf %20, %22 : vector<32x128xf32>
    %cst_22 = arith.constant 0.000000e+00 : f32
    %24 = vector.broadcast %cst_22 : f32 to vector<32x128xf32>
    %25 = arith.maximumf %23, %24 : vector<32x128xf32>
    %c0_23 = arith.constant 0 : index
    %c0_24 = arith.constant 0 : index
    %26 = vector.load %arg10[%c0_23, %c0_24] : memref<32x1xf32, #tpu.memory_space<vmem>>, vector<32x1xf32>
    %27 = vector.broadcast %26 : vector<32x1xf32> to vector<32x128xf32>
    %28 = arith.mulf %25, %27 : vector<32x128xf32>
    %cst_25 = arith.constant dense<0.000000e+00> : vector<128xf32>
    %29 = vector.multi_reduction <add>, %28, %cst_25 [0] : vector<32x128xf32> to vector<128xf32>
    %30 = vector.shape_cast %29 : vector<128xf32> to vector<1x128xf32>
    %c0_26 = arith.constant 0 : index
    %c0_27 = arith.constant 0 : index
    %31 = vector.load %arg11[%c0_26, %c0_27] : memref<1x1xf32, #tpu.memory_space<vmem>>, vector<1x1xf32>
    %32 = vector.broadcast %31 : vector<1x1xf32> to vector<1x128xf32>
    %33 = arith.addf %30, %32 : vector<1x128xf32>
    %c0_28 = arith.constant 0 : index
    %c0_29 = arith.constant 0 : index
    %34 = vector.load %arg12[%c0_28, %c0_29] : memref<1x128xf32, #tpu.memory_space<vmem>>, vector<1x128xf32>
    tpu.vector_store %arg12[%c0_28, %c0_29], %33 {strides = array<i32>} : memref<1x128xf32, #tpu.memory_space<vmem>>, vector<1x128xf32>,
    return
  }
  func.func @transform_0(%arg0: i32) -> (i32, i32) {
    %c0_i32 = arith.constant 0 : i32
    %c0_i32_0 = arith.constant 0 : i32
    return %arg0, %c0_i32 : i32, i32
  }
  func.func @transform_1(%arg0: i32) -> (i32, i32) {
    %c0_i32 = arith.constant 0 : i32
    %c0_i32_0 = arith.constant 0 : i32
    return %arg0, %c0_i32 : i32, i32
  }
  func.func @transform_2(%arg0: i32) -> (i32, i32) {
    %c0_i32 = arith.constant 0 : i32
    %c0_i32_0 = arith.constant 0 : i32
    %c0_i32_1 = arith.constant 0 : i32
    return %c0_i32, %c0_i32_0 : i32, i32
  }
  func.func @transform_3(%arg0: i32) -> (i32, i32) {
    %c0_i32 = arith.constant 0 : i32
    %c0_i32_0 = arith.constant 0 : i32
    %c0_i32_1 = arith.constant 0 : i32
    return %c0_i32, %c0_i32_0 : i32, i32
  }
  func.func @transform_4(%arg0: i32) -> (i32, i32) {
    %c0_i32 = arith.constant 0 : i32
    %c0_i32_0 = arith.constant 0 : i32
    %c0_i32_1 = arith.constant 0 : i32
    return %c0_i32, %c0_i32_0 : i32, i32
  }
  func.func @transform_5(%arg0: i32) -> (i32, i32) {
    %c0_i32 = arith.constant 0 : i32
    %c0_i32_0 = arith.constant 0 : i32
    %c0_i32_1 = arith.constant 0 : i32
    return %c0_i32, %c0_i32_0 : i32, i32
  }
  func.func @transform_6(%arg0: i32) -> (i32, i32) {
    %c0_i32 = arith.constant 0 : i32
    %c0_i32_0 = arith.constant 0 : i32
    %c0_i32_1 = arith.constant 0 : i32
    return %c0_i32, %c0_i32_0 : i32, i32
  }
  func.func @transform_7(%arg0: i32) -> (i32, i32) {
    %c0_i32 = arith.constant 0 : i32
    %c0_i32_0 = arith.constant 0 : i32
    %c0_i32_1 = arith.constant 0 : i32
    return %c0_i32, %c0_i32_0 : i32, i32
  }
  func.func @transform_8(%arg0: i32) -> (i32, i32) {
    %c0_i32 = arith.constant 0 : i32
    %c0_i32_0 = arith.constant 0 : i32
    %c0_i32_1 = arith.constant 0 : i32
    return %c0_i32, %c0_i32_0 : i32, i32
  }
  func.func @transform_9(%arg0: i32) -> (i32, i32) {
    %c0_i32 = arith.constant 0 : i32
    %c0_i32_0 = arith.constant 0 : i32
    %c0_i32_1 = arith.constant 0 : i32
    return %c0_i32, %c0_i32_0 : i32, i32
  }
  func.func @transform_10(%arg0: i32) -> (i32, i32) {
    %c0_i32 = arith.constant 0 : i32
    %c0_i32_0 = arith.constant 0 : i32
    %c0_i32_1 = arith.constant 0 : i32
    return %c0_i32, %c0_i32_0 : i32, i32
  }
  func.func @transform_11(%arg0: i32) -> (i32, i32) {
    %c0_i32 = arith.constant 0 : i32
    %c0_i32_0 = arith.constant 0 : i32
    return %c0_i32, %arg0 : i32, i32
  }
}

</mosaic_0001>

<llo_original>
// kernel: tpu_custom_call.1
$region0: #{tpu_custom_call.1}
  #allocation0 [shape = 'u32[]', space=smem, size = 0x4, offset = 0x4, fixed_abs, tag = 'smem constant byte address 0x4 - core index']
  #allocation1 [shape = 'u32[144,128]{1,0:T(1,128)}', space=vmem, size = 0x12000, scoped, tag = 'internal scratch']
  #allocation2 [shape = 'f32[1,1]{1,0:T(1,128)S(1)}', space=vmem, size = 0x200, scoped, tag = 'scoped memory for tpu_custom_call.1']
  %s0 = inlined_call_operand.vmem [shape: f32[2,11], index: 0, kind: input, shape index: {}]
  %s1 = inlined_call_operand.vmem [shape: f32[2,4], index: 1, kind: input, shape index: {}]
  %s2 = inlined_call_operand.vmem [shape: f32[32,11], index: 2, kind: input, shape index: {}]
  %s3 = inlined_call_operand.vmem [shape: f32[32,4], index: 3, kind: input, shape index: {}]
  %s4 = inlined_call_operand.vmem [shape: f32[32,1], index: 4, kind: input, shape index: {}]
  %s5 = inlined_call_operand.vmem [shape: f32[32,32], index: 5, kind: input, shape index: {}]
  %s6 = inlined_call_operand.vmem [shape: f32[32,1], index: 6, kind: input, shape index: {}]
  %s7 = inlined_call_operand.vmem [shape: f32[32,32], index: 7, kind: input, shape index: {}]
  %s8 = inlined_call_operand.vmem [shape: f32[32,1], index: 8, kind: input, shape index: {}]
  %s9 = inlined_call_operand.vmem [shape: f32[32,1], index: 9, kind: input, shape index: {}]
  %s10 = inlined_call_operand.<no memory space> [shape: f32[1,1], index: 10, kind: input, shape index: {}]
  %s11 = inlined_call_operand.hbm [shape: f32[1,2], index: 11, kind: output, shape index: {}]
  %s12 = sld [smem:[#allocation0]]
  $region54: #{tpu_custom_call.1} parent=0
    _
  %s14 = ssub.s32 1, %s12
  %s15 = scalar_select 0, %s14, %s12
  %v16 = vstv %s10
  %17 = vst [vmem:[#allocation2] sm:$0x1] %v16
  $region1: #{tpu_custom_call.1} parent=0
    #allocation3 [shape = 'u8[512]{0}', space=vmem, size = 0x400, scoped, tag = 'output window, operand 0, single buffered']
    #allocation4 [shape = 's32[1]{0}', space=sflag, size = 0x4, scoped, tag = 'scoped memory for tpu_custom_call.1']
    %18 = vsyncpa [#allocation4], 0
    // Predicated region
    $region2: #{tpu_custom_call.1} parent=1 // pred_check
      _
    $region3: #{tpu_custom_call.1} parent=1 // pred_check_branch
      %20 = sbr.rel (0) target = $region5
    $region4: #{tpu_custom_call.1} parent=1 // pred_region
      _
    $region5: #{tpu_custom_call.1} parent=1 // pred_fallthru
      _
    // Predicated region
    $region6: #{tpu_custom_call.1} parent=1 // pred_check
      _
    $region7: #{tpu_custom_call.1} parent=1 // pred_check_branch
      %22 = sbr.rel (0) target = $region9
    $region8: #{tpu_custom_call.1} parent=1 // pred_region
      _
    $region9: #{tpu_custom_call.1} parent=1 // pred_fallthru
      _
    // Predicated region
    $region10: #{tpu_custom_call.1} parent=1 // pred_check
      _
    $region11: #{tpu_custom_call.1} parent=1 // pred_check_branch
      %24 = sbr.rel (0) target = $region13
    $region12: #{tpu_custom_call.1} parent=1 // pred_region
      _
    $region13: #{tpu_custom_call.1} parent=1 // pred_fallthru
      _
    // Predicated region
    $region14: #{tpu_custom_call.1} parent=1 // pred_check
      _
    $region15: #{tpu_custom_call.1} parent=1 // pred_check_branch
      %26 = sbr.rel (0) target = $region17
    $region16: #{tpu_custom_call.1} parent=1 // pred_region
      _
    $region17: #{tpu_custom_call.1} parent=1 // pred_fallthru
      _
    // Predicated region
    $region18: #{tpu_custom_call.1} parent=1 // pred_check
      _
    $region19: #{tpu_custom_call.1} parent=1 // pred_check_branch
      %28 = sbr.rel (0) target = $region21
    $region20: #{tpu_custom_call.1} parent=1 // pred_region
      _
    $region21: #{tpu_custom_call.1} parent=1 // pred_fallthru
      _
    // Predicated region
    $region22: #{tpu_custom_call.1} parent=1 // pred_check
      _
    $region23: #{tpu_custom_call.1} parent=1 // pred_check_branch
      %30 = sbr.rel (0) target = $region25
    $region24: #{tpu_custom_call.1} parent=1 // pred_region
      _
    $region25: #{tpu_custom_call.1} parent=1 // pred_fallthru
      _
    // Predicated region
    $region26: #{tpu_custom_call.1} parent=1 // pred_check
      _
    $region27: #{tpu_custom_call.1} parent=1 // pred_check_branch
      %32 = sbr.rel (0) target = $region29
    $region28: #{tpu_custom_call.1} parent=1 // pred_region
      _
    $region29: #{tpu_custom_call.1} parent=1 // pred_fallthru
      _
    // Predicated region
    $region30: #{tpu_custom_call.1} parent=1 // pred_check
      _
    $region31: #{tpu_custom_call.1} parent=1 // pred_check_branch
      %34 = sbr.rel (0) target = $region33
    $region32: #{tpu_custom_call.1} parent=1 // pred_region
      _
    $region33: #{tpu_custom_call.1} parent=1 // pred_fallthru
      _
    // Predicated region
    $region34: #{tpu_custom_call.1} parent=1 // pred_check
      _
    $region35: #{tpu_custom_call.1} parent=1 // pred_check_branch
      %36 = sbr.rel (0) target = $region37
    $region36: #{tpu_custom_call.1} parent=1 // pred_region
      _
    $region37: #{tpu_custom_call.1} parent=1 // pred_fallthru
      _
    // Predicated region
    $region38: #{tpu_custom_call.1} parent=1 // pred_check
      _
    $region39: #{tpu_custom_call.1} parent=1 // pred_check_branch
      %38 = sbr.rel (0) target = $region41
    $region40: #{tpu_custom_call.1} parent=1 // pred_region
      _
    $region41: #{tpu_custom_call.1} parent=1 // pred_fallthru
      _
    // Predicated region
    $region42: #{tpu_custom_call.1} parent=1 // pred_check
      _
    $region43: #{tpu_custom_call.1} parent=1 // pred_check_branch
      %40 = sbr.rel (0) target = $region45
    $region44: #{tpu_custom_call.1} parent=1 // pred_region
      _
    $region45: #{tpu_custom_call.1} parent=1 // pred_fallthru
      _
    %v41 = vld [vmem:[%s0] sm:$0xff]
    %v42 = vld [vmem:[%s0 + $0x8] sm:$0xff]
    %v43 = vld [vmem:[%s0 + $0x10] sm:$0xff]
    %v44 = vld [vmem:[%s0 + $0x18] sm:$0xff]
    %v45 = vld [vmem:[%s0 + $0x20] sm:$0xff]
    %v46 = vld [vmem:[%s0 + $0x28] sm:$0xff]
    %v47 = vld [vmem:[%s0 + $0x30] sm:$0xff]
    %v48 = vld [vmem:[%s0 + $0x38] sm:$0xff]
    %v49 = vld [vmem:[%s0 + $0x40] sm:$0xff]
    %v50 = vld [vmem:[%s0 + $0x48] sm:$0xff]
    %v51 = vld [vmem:[%s0 + $0x50] sm:$0xff]
    %v52 = vld [vmem:[%s0 + $0x58] sm:$0xff]
    %v53 = vld [vmem:[%s0 + $0x60] sm:$0xff]
    %v54 = vld [vmem:[%s0 + $0x68] sm:$0xff]
    %v55 = vld [vmem:[%s0 + $0x70] sm:$0xff]
    %v56 = vld [vmem:[%s0 + $0x78] sm:$0xff]
    %v57 = vld [vmem:[%s1] sm:$0xff]
    %v58 = vld [vmem:[%s1 + $0x8] sm:$0xff]
    %v59 = vld [vmem:[%s1 + $0x10] sm:$0xff]
    %v60 = vld [vmem:[%s1 + $0x18] sm:$0xff]
    %v61 = vld [vmem:[%s1 + $0x20] sm:$0xff]
    %v62 = vld [vmem:[%s1 + $0x28] sm:$0xff]
    %v63 = vld [vmem:[%s1 + $0x30] sm:$0xff]
    %v64 = vld [vmem:[%s1 + $0x38] sm:$0xff]
    %v65 = vld [vmem:[%s1 + $0x40] sm:$0xff]
    %v66 = vld [vmem:[%s1 + $0x48] sm:$0xff]
    %v67 = vld [vmem:[%s1 + $0x50] sm:$0xff]
    %v68 = vld [vmem:[%s1 + $0x58] sm:$0xff]
    %v69 = vld [vmem:[%s1 + $0x60] sm:$0xff]
    %v70 = vld [vmem:[%s1 + $0x68] sm:$0xff]
    %v71 = vld [vmem:[%s1 + $0x70] sm:$0xff]
    %v72 = vld [vmem:[%s1 + $0x78] sm:$0xff]
    %v73 = vld [vmem:[%s2] sm:$0xff]
    %v74 = vld [vmem:[%s2 + $0x8] sm:$0xff]
    %v75 = vld [vmem:[%s2 + $0x10] sm:$0xff]
    %v76 = vld [vmem:[%s2 + $0x18] sm:$0xff]
    %v77 = vld [vmem:[%s3] sm:$0xff]
    %v78 = vld [vmem:[%s3 + $0x8] sm:$0xff]
    %v79 = vld [vmem:[%s3 + $0x10] sm:$0xff]
    %v80 = vld [vmem:[%s3 + $0x18] sm:$0xff]
    %vm81 = vcmask 31744
    %v83 = vsel %vm81, %v77, 0
    %v86 = vsel %vm81, %v78, 0
    %v89 = vsel %vm81, %v79, 0
    %v92 = vsel %vm81, %v80, 0
    %v95 = vsel %vm81, %v57, 0
    %v98 = vsel %vm81, %v58, 0
    %v101 = vsel %vm81, %v59, 0
    %v104 = vsel %vm81, %v60, 0
    %v107 = vsel %vm81, %v61, 0
    %v110 = vsel %vm81, %v62, 0
    %v113 = vsel %vm81, %v63, 0
    %v116 = vsel %vm81, %v64, 0
    %v119 = vsel %vm81, %v65, 0
    %v122 = vsel %vm81, %v66, 0
    %v125 = vsel %vm81, %v67, 0
    %v128 = vsel %vm81, %v68, 0
    %v131 = vsel %vm81, %v69, 0
    %v134 = vsel %vm81, %v70, 0
    %v137 = vsel %vm81, %v71, 0
    %v140 = vsel %vm81, %v72, 0
    %142 = vmatprep.subr.mxu0 0.0
    %143 = vmatpush1.xpose.msra.mxu0 %v95
    %144 = vmatprep.subr.mxu0 0.0
    %145 = vmatpush1.xpose.msra.mxu0 %v98
    %146 = vmatprep.subr.mxu0 0.0
    %147 = vmatpush1.xpose.msra.mxu0 %v101
    %148 = vmatprep.subr.mxu0 0.0
    %149 = vmatpush1.xpose.msra.mxu0 %v104
    %150 = vmatprep.subr.mxu0 0.0
    %151 = vmatpush1.xpose.msra.mxu0 %v107
    %152 = vmatprep.subr.mxu0 0.0
    %153 = vmatpush1.xpose.msra.mxu0 %v110
    %154 = vmatprep.subr.mxu0 0.0
    %155 = vmatpush1.xpose.msra.mxu0 %v113
    %156 = vmatprep.subr.mxu0 0.0
    %157 = vmatpush1.xpose.msra.mxu0 %v116
    %158 = vmatprep.subr.mxu0 0.0
    %159 = vmatpush1.xpose.msra.mxu0 %v119
    %160 = vmatprep.subr.mxu0 0.0
    %161 = vmatpush1.xpose.msra.mxu0 %v122
    %162 = vmatprep.subr.mxu0 0.0
    %163 = vmatpush1.xpose.msra.mxu0 %v125
    %164 = vmatprep.subr.mxu0 0.0
    %165 = vmatpush1.xpose.msra.mxu0 %v128
    %166 = vmatprep.subr.mxu0 0.0
    %167 = vmatpush1.xpose.msra.mxu0 %v131
    %168 = vmatprep.subr.mxu0 0.0
    %169 = vmatpush1.xpose.msra.mxu0 %v134
    %170 = vmatprep.subr.mxu0 0.0
    %171 = vmatpush1.xpose.msra.mxu0 %v137
    %172 = vmatprep.subr.mxu0 0.0
    %173 = vmatpush1.xpose.msra.mxu0 %v140
    %174 = vmatprep.subr.mxu0 0.0
    %175 = vmatpush1.xpose.msra.mxu0 0.0
    %176 = vmatprep.subr.mxu0 0.0
    %177 = vmatpush1.xpose.msra.mxu0 0.0
    %178 = vmatprep.subr.mxu0 0.0
    %179 = vmatpush1.xpose.msra.mxu0 0.0
    %180 = vmatprep.subr.mxu0 0.0
    %181 = vmatpush1.xpose.msra.mxu0 0.0
    %182 = vmatprep.subr.mxu0 0.0
    %183 = vmatpush1.xpose.msra.mxu0 0.0
    %184 = vmatprep.subr.mxu0 0.0
    %185 = vmatpush1.xpose.msra.mxu0 0.0
    %186 = vmatprep.subr.mxu0 0.0
    %187 = vmatpush1.xpose.msra.mxu0 0.0
    %188 = vmatprep.subr.mxu0 0.0
    %189 = vmatpush1.xpose.msra.mxu0 0.0
    %190 = vmatprep.subr.mxu0 0.0
    %191 = vmatpush1.xpose.msra.mxu0 0.0
    %192 = vmatprep.subr.mxu0 0.0
    %193 = vmatpush1.xpose.msra.mxu0 0.0
    %194 = vmatprep.subr.mxu0 0.0
    %195 = vmatpush1.xpose.msra.mxu0 0.0
    %196 = vmatprep.subr.mxu0 0.0
    %197 = vmatpush1.xpose.msra.mxu0 0.0
    %198 = vmatprep.subr.mxu0 0.0
    %199 = vmatpush1.xpose.msra.mxu0 0.0
    %200 = vmatprep.subr.mxu0 0.0
    %201 = vmatpush1.xpose.msra.mxu0 0.0
    %202 = vmatprep.subr.mxu0 0.0
    %203 = vmatpush1.xpose.msra.mxu0 0.0
    %204 = vmatprep.subr.mxu0 0.0
    %205 = vmatpush1.xpose.msra.mxu0 0.0
    %206 = vmatprep.mubr.f32.mxu0 0.0
    %207 = vmatmul.mubr.f32.gmra.mrb[0].mxu0 %v83
    %v208 = vpop.f32.mrb[0].mxu0
    %v209 = vadd.f32 0.0, %v208
    %v210 = vpop.f32.mrb[0].mxu0
    %211 = vmatprep.mubr.f32.mxu0 0.0
    %212 = vmatmul.mubr.f32.gmra.mrb[0].mxu0 %v86
    %v213 = vpop.f32.mrb[0].mxu0
    %v214 = vadd.f32 0.0, %v213
    %v215 = vpop.f32.mrb[0].mxu0
    %216 = vmatprep.mubr.f32.mxu0 0.0
    %217 = vmatmul.mubr.f32.gmra.mrb[0].mxu0 %v89
    %v218 = vpop.f32.mrb[0].mxu0
    %v219 = vadd.f32 0.0, %v218
    %v220 = vpop.f32.mrb[0].mxu0
    %221 = vmatprep.mubr.f32.mxu0 0.0
    %222 = vmatmul.mubr.f32.gmra.mrb[0].mxu0 %v92
    %v223 = vpop.f32.mrb[0].mxu0
    %v224 = vadd.f32 0.0, %v223
    %v225 = vpop.f32.mrb[0].mxu0
    %226 = vdwg.mxu0
    %vm227 = vcmask 89088
    %v229 = vsel %vm227, %v73, 0
    %v232 = vsel %vm227, %v74, 0
    %v235 = vsel %vm227, %v75, 0
    %v238 = vsel %vm227, %v76, 0
    %v241 = vsel %vm227, %v41, 0
    %v244 = vsel %vm227, %v42, 0
    %v247 = vsel %vm227, %v43, 0
    %v250 = vsel %vm227, %v44, 0
    %v253 = vsel %vm227, %v45, 0
    %v256 = vsel %vm227, %v46, 0
    %v259 = vsel %vm227, %v47, 0
    %v262 = vsel %vm227, %v48, 0
    %v265 = vsel %vm227, %v49, 0
    %v268 = vsel %vm227, %v50, 0
    %v271 = vsel %vm227, %v51, 0
    %v274 = vsel %vm227, %v52, 0
    %v277 = vsel %vm227, %v53, 0
    %v280 = vsel %vm227, %v54, 0
    %v283 = vsel %vm227, %v55, 0
    %v286 = vsel %vm227, %v56, 0
    %288 = vmatprep.subr.mxu0 0.0
    %289 = vmatpush1.xpose.msra.mxu0 %v241
    %290 = vmatprep.subr.mxu0 0.0
    %291 = vmatpush1.xpose.msra.mxu0 %v244
    %292 = vmatprep.subr.mxu0 0.0
    %293 = vmatpush1.xpose.msra.mxu0 %v247
    %294 = vmatprep.subr.mxu0 0.0
    %295 = vmatpush1.xpose.msra.mxu0 %v250
    %296 = vmatprep.subr.mxu0 0.0
    %297 = vmatpush1.xpose.msra.mxu0 %v253
    %298 = vmatprep.subr.mxu0 0.0
    %299 = vmatpush1.xpose.msra.mxu0 %v256
    %300 = vmatprep.subr.mxu0 0.0
    %301 = vmatpush1.xpose.msra.mxu0 %v259
    %302 = vmatprep.subr.mxu0 0.0
    %303 = vmatpush1.xpose.msra.mxu0 %v262
    %304 = vmatprep.subr.mxu0 0.0
    %305 = vmatpush1.xpose.msra.mxu0 %v265
    %306 = vmatprep.subr.mxu0 0.0
    %307 = vmatpush1.xpose.msra.mxu0 %v268
    %308 = vmatprep.subr.mxu0 0.0
    %309 = vmatpush1.xpose.msra.mxu0 %v271
    %310 = vmatprep.subr.mxu0 0.0
    %311 = vmatpush1.xpose.msra.mxu0 %v274
    %312 = vmatprep.subr.mxu0 0.0
    %313 = vmatpush1.xpose.msra.mxu0 %v277
    %314 = vmatprep.subr.mxu0 0.0
    %315 = vmatpush1.xpose.msra.mxu0 %v280
    %316 = vmatprep.subr.mxu0 0.0
    %317 = vmatpush1.xpose.msra.mxu0 %v283
    %318 = vmatprep.subr.mxu0 0.0
    %319 = vmatpush1.xpose.msra.mxu0 %v286
    %320 = vmatprep.subr.mxu0 0.0
    %321 = vmatpush1.xpose.msra.mxu0 0.0
    %322 = vmatprep.subr.mxu0 0.0
    %323 = vmatpush1.xpose.msra.mxu0 0.0
    %324 = vmatprep.subr.mxu0 0.0
    %325 = vmatpush1.xpose.msra.mxu0 0.0
    %326 = vmatprep.subr.mxu0 0.0
    %327 = vmatpush1.xpose.msra.mxu0 0.0
    %328 = vmatprep.subr.mxu0 0.0
    %329 = vmatpush1.xpose.msra.mxu0 0.0
    %330 = vmatprep.subr.mxu0 0.0
    %331 = vmatpush1.xpose.msra.mxu0 0.0
    %332 = vmatprep.subr.mxu0 0.0
    %333 = vmatpush1.xpose.msra.mxu0 0.0
    %334 = vmatprep.subr.mxu0 0.0
    %335 = vmatpush1.xpose.msra.mxu0 0.0
    %336 = vmatprep.subr.mxu0 0.0
    %337 = vmatpush1.xpose.msra.mxu0 0.0
    %338 = vmatprep.subr.mxu0 0.0
    %339 = vmatpush1.xpose.msra.mxu0 0.0
    %340 = vmatprep.subr.mxu0 0.0
    %341 = vmatpush1.xpose.msra.mxu0 0.0
    %342 = vmatprep.subr.mxu0 0.0
    %343 = vmatpush1.xpose.msra.mxu0 0.0
    %344 = vmatprep.subr.mxu0 0.0
    %345 = vmatpush1.xpose.msra.mxu0 0.0
    %346 = vmatprep.subr.mxu0 0.0
    %347 = vmatpush1.xpose.msra.mxu0 0.0
    %348 = vmatprep.subr.mxu0 0.0
    %349 = vmatpush1.xpose.msra.mxu0 0.0
    %350 = vmatprep.subr.mxu0 0.0
    %351 = vmatpush1.xpose.msra.mxu0 0.0
    %352 = vmatprep.mubr.f32.mxu0 0.0
    %353 = vmatmul.mubr.f32.gmra.mrb[0].mxu0 %v229
    %v354 = vpop.f32.mrb[0].mxu0
    %v355 = vadd.f32 %v209, %v354
    %v356 = vpop.f32.mrb[0].mxu0
    %357 = vmatprep.mubr.f32.mxu0 0.0
    %358 = vmatmul.mubr.f32.gmra.mrb[0].mxu0 %v232
    %v359 = vpop.f32.mrb[0].mxu0
    %v360 = vadd.f32 %v214, %v359
    %v361 = vpop.f32.mrb[0].mxu0
    %362 = vmatprep.mubr.f32.mxu0 0.0
    %363 = vmatmul.mubr.f32.gmra.mrb[0].mxu0 %v235
    %v364 = vpop.f32.mrb[0].mxu0
    %v365 = vadd.f32 %v219, %v364
    %v366 = vpop.f32.mrb[0].mxu0
    %367 = vmatprep.mubr.f32.mxu0 0.0
    %368 = vmatmul.mubr.f32.gmra.mrb[0].mxu0 %v238
    %v369 = vpop.f32.mrb[0].mxu0
    %v370 = vadd.f32 %v224, %v369
    %v371 = vpop.f32.mrb[0].mxu0
    %372 = vdwg.mxu0
    %v373 = vld [vmem:[%s4] sm:$0xff]
    %v374 = vld [vmem:[%s4 + $0x8] sm:$0xff]
    %v375 = vld [vmem:[%s4 + $0x10] sm:$0xff]
    %v376 = vld [vmem:[%s4 + $0x18] sm:$0xff]
    %378 = vset.pattern.permute.xlu0 0
    %379 = vperm.xlu0 %378, %v373
    %v380 = vpop.permute.xlu0 %379
    %383 = vset.pattern.permute.xlu0 0
    %384 = vperm.xlu0 %383, %v374
    %v385 = vpop.permute.xlu0 %384
    %388 = vset.pattern.permute.xlu0 0
    %389 = vperm.xlu0 %388, %v375
    %v390 = vpop.permute.xlu0 %389
    %393 = vset.pattern.permute.xlu0 0
    %394 = vperm.xlu0 %393, %v376
    %v395 = vpop.permute.xlu0 %394
    %v397 = vadd.f32 %v355, %v380
    %v398 = vadd.f32 %v360, %v385
    %v399 = vadd.f32 %v365, %v390
    %v400 = vadd.f32 %v370, %v395
    %v401 = vmax.f32 %v397, 0.0
    %v402 = vmax.f32 %v398, 0.0
    %v403 = vmax.f32 %v399, 0.0
    %v404 = vmax.f32 %v400, 0.0
    %v405 = vld [vmem:[%s5] sm:$0xff]
    %v406 = vld [vmem:[%s5 + $0x8] sm:$0xff]
    %v407 = vld [vmem:[%s5 + $0x10] sm:$0xff]
    %v408 = vld [vmem:[%s5 + $0x18] sm:$0xff]
    %v409 = vld [vmem:[%s6] sm:$0xff]
    %v410 = vld [vmem:[%s6 + $0x8] sm:$0xff]
    %v411 = vld [vmem:[%s6 + $0x10] sm:$0xff]
    %v412 = vld [vmem:[%s6 + $0x18] sm:$0xff]
    %414 = vset.pattern.permute.xlu0 0
    %415 = vperm.xlu0 %414, %v409
    %v416 = vpop.permute.xlu0 %415
    %419 = vset.pattern.permute.xlu0 0
    %420 = vperm.xlu0 %419, %v410
    %v421 = vpop.permute.xlu0 %420
    %424 = vset.pattern.permute.xlu0 0
    %425 = vperm.xlu0 %424, %v411
    %v426 = vpop.permute.xlu0 %425
    %429 = vset.pattern.permute.xlu0 0
    %430 = vperm.xlu0 %429, %v412
    %v431 = vpop.permute.xlu0 %430
    %vm433 = vcmask 261120
    %v435 = vsel %vm433, %v405, 0
    %v438 = vsel %vm433, %v406, 0
    %v441 = vsel %vm433, %v407, 0
    %v444 = vsel %vm433, %v408, 0
    %446 = vmatprep.subr.mxu0 0.0
    %447 = vmatpush1.msra.mxu0 %v401
    %448 = vmatprep.subr.mxu0 0.0
    %449 = vmatpush1.msra.mxu0 %v402
    %450 = vmatprep.subr.mxu0 0.0
    %451 = vmatpush1.msra.mxu0 %v403
    %452 = vmatprep.subr.mxu0 0.0
    %453 = vmatpush1.msra.mxu0 %v404
    %454 = vmatprep.subr.mxu0 0.0
    %455 = vmatpush1.msra.mxu0 0.0
    %456 = vmatprep.subr.mxu0 0.0
    %457 = vmatpush1.msra.mxu0 0.0
    %458 = vmatprep.subr.mxu0 0.0
    %459 = vmatpush1.msra.mxu0 0.0
    %460 = vmatprep.subr.mxu0 0.0
    %461 = vmatpush1.msra.mxu0 0.0
    %462 = vmatprep.subr.mxu0 0.0
    %463 = vmatpush1.msra.mxu0 0.0
    %464 = vmatprep.subr.mxu0 0.0
    %465 = vmatpush1.msra.mxu0 0.0
    %466 = vmatprep.subr.mxu0 0.0
    %467 = vmatpush1.msra.mxu0 0.0
    %468 = vmatprep.subr.mxu0 0.0
    %469 = vmatpush1.msra.mxu0 0.0
    %470 = vmatprep.subr.mxu0 0.0
    %471 = vmatpush1.msra.mxu0 0.0
    %472 = vmatprep.subr.mxu0 0.0
    %473 = vmatpush1.msra.mxu0 0.0
    %474 = vmatprep.subr.mxu0 0.0
    %475 = vmatpush1.msra.mxu0 0.0
    %476 = vmatprep.subr.mxu0 0.0
    %477 = vmatpush1.msra.mxu0 0.0
    %478 = vmatprep.subr.mxu0 0.0
    %479 = vmatpush1.msra.mxu0 0.0
    %480 = vmatprep.subr.mxu0 0.0
    %481 = vmatpush1.msra.mxu0 0.0
    %482 = vmatprep.subr.mxu0 0.0
    %483 = vmatpush1.msra.mxu0 0.0
    %484 = vmatprep.subr.mxu0 0.0
    %485 = vmatpush1.msra.mxu0 0.0
    %486 = vmatprep.subr.mxu0 0.0
    %487 = vmatpush1.msra.mxu0 0.0
    %488 = vmatprep.subr.mxu0 0.0
    %489 = vmatpush1.msra.mxu0 0.0
    %490 = vmatprep.subr.mxu0 0.0
    %491 = vmatpush1.msra.mxu0 0.0
    %492 = vmatprep.subr.mxu0 0.0
    %493 = vmatpush1.msra.mxu0 0.0
    %494 = vmatprep.subr.mxu0 0.0
    %495 = vmatpush1.msra.mxu0 0.0
    %496 = vmatprep.subr.mxu0 0.0
    %497 = vmatpush1.msra.mxu0 0.0
    %498 = vmatprep.subr.mxu0 0.0
    %499 = vmatpush1.msra.mxu0 0.0
    %500 = vmatprep.subr.mxu0 0.0
    %501 = vmatpush1.msra.mxu0 0.0
    %502 = vmatprep.subr.mxu0 0.0
    %503 = vmatpush1.msra.mxu0 0.0
    %504 = vmatprep.subr.mxu0 0.0
    %505 = vmatpush1.msra.mxu0 0.0
    %506 = vmatprep.subr.mxu0 0.0
    %507 = vmatpush1.msra.mxu0 0.0
    %508 = vmatprep.subr.mxu0 0.0
    %509 = vmatpush1.msra.mxu0 0.0
    %510 = vmatprep.mubr.f32.mxu0 0.0
    %511 = vmatmul.mubr.f32.gmra.mrb[0].mxu0 %v435
    %v512 = vpop.f32.mrb[0].mxu0
    %v513 = vadd.f32 %v416, %v512
    %v514 = vpop.f32.mrb[0].mxu0
    %515 = vmatprep.mubr.f32.mxu0 0.0
    %516 = vmatmul.mubr.f32.gmra.mrb[0].mxu0 %v438
    %v517 = vpop.f32.mrb[0].mxu0
    %v518 = vadd.f32 %v421, %v517
    %v519 = vpop.f32.mrb[0].mxu0
    %520 = vmatprep.mubr.f32.mxu0 0.0
    %521 = vmatmul.mubr.f32.gmra.mrb[0].mxu0 %v441
    %v522 = vpop.f32.mrb[0].mxu0
    %v523 = vadd.f32 %v426, %v522
    %v524 = vpop.f32.mrb[0].mxu0
    %525 = vmatprep.mubr.f32.mxu0 0.0
    %526 = vmatmul.mubr.f32.gmra.mrb[0].mxu0 %v444
    %v527 = vpop.f32.mrb[0].mxu0
    %v528 = vadd.f32 %v431, %v527
    %v529 = vpop.f32.mrb[0].mxu0
    %530 = vdwg.mxu0
    %v531 = vmax.f32 %v513, 0.0
    %v532 = vmax.f32 %v518, 0.0
    %v533 = vmax.f32 %v523, 0.0
    %v534 = vmax.f32 %v528, 0.0
    %v535 = vld [vmem:[%s7] sm:$0xff]
    %v536 = vld [vmem:[%s7 + $0x8] sm:$0xff]
    %v537 = vld [vmem:[%s7 + $0x10] sm:$0xff]
    %v538 = vld [vmem:[%s7 + $0x18] sm:$0xff]
    %v539 = vld [vmem:[%s8] sm:$0xff]
    %v540 = vld [vmem:[%s8 + $0x8] sm:$0xff]
    %v541 = vld [vmem:[%s8 + $0x10] sm:$0xff]
    %v542 = vld [vmem:[%s8 + $0x18] sm:$0xff]
    %544 = vset.pattern.permute.xlu0 0
    %545 = vperm.xlu0 %544, %v539
    %v546 = vpop.permute.xlu0 %545
    %549 = vset.pattern.permute.xlu0 0
    %550 = vperm.xlu0 %549, %v540
    %v551 = vpop.permute.xlu0 %550
    %554 = vset.pattern.permute.xlu0 0
    %555 = vperm.xlu0 %554, %v541
    %v556 = vpop.permute.xlu0 %555
    %559 = vset.pattern.permute.xlu0 0
    %560 = vperm.xlu0 %559, %v542
    %v561 = vpop.permute.xlu0 %560
    %v564 = vsel %vm433, %v535, 0
    %v567 = vsel %vm433, %v536, 0
    %v570 = vsel %vm433, %v537, 0
    %v573 = vsel %vm433, %v538, 0
    %575 = vmatprep.subr.mxu0 0.0
    %576 = vmatpush1.msra.mxu0 %v531
    %577 = vmatprep.subr.mxu0 0.0
    %578 = vmatpush1.msra.mxu0 %v532
    %579 = vmatprep.subr.mxu0 0.0
    %580 = vmatpush1.msra.mxu0 %v533
    %581 = vmatprep.subr.mxu0 0.0
    %582 = vmatpush1.msra.mxu0 %v534
    %583 = vmatprep.subr.mxu0 0.0
    %584 = vmatpush1.msra.mxu0 0.0
    %585 = vmatprep.subr.mxu0 0.0
    %586 = vmatpush1.msra.mxu0 0.0
    %587 = vmatprep.subr.mxu0 0.0
    %588 = vmatpush1.msra.mxu0 0.0
    %589 = vmatprep.subr.mxu0 0.0
    %590 = vmatpush1.msra.mxu0 0.0
    %591 = vmatprep.subr.mxu0 0.0
    %592 = vmatpush1.msra.mxu0 0.0
    %593 = vmatprep.subr.mxu0 0.0
    %594 = vmatpush1.msra.mxu0 0.0
    %595 = vmatprep.subr.mxu0 0.0
    %596 = vmatpush1.msra.mxu0 0.0
    %597 = vmatprep.subr.mxu0 0.0
    %598 = vmatpush1.msra.mxu0 0.0
    %599 = vmatprep.subr.mxu0 0.0
    %600 = vmatpush1.msra.mxu0 0.0
    %601 = vmatprep.subr.mxu0 0.0
    %602 = vmatpush1.msra.mxu0 0.0
    %603 = vmatprep.subr.mxu0 0.0
    %604 = vmatpush1.msra.mxu0 0.0
    %605 = vmatprep.subr.mxu0 0.0
    %606 = vmatpush1.msra.mxu0 0.0
    %607 = vmatprep.subr.mxu0 0.0
    %608 = vmatpush1.msra.mxu0 0.0
    %609 = vmatprep.subr.mxu0 0.0
    %610 = vmatpush1.msra.mxu0 0.0
    %611 = vmatprep.subr.mxu0 0.0
    %612 = vmatpush1.msra.mxu0 0.0
    %613 = vmatprep.subr.mxu0 0.0
    %614 = vmatpush1.msra.mxu0 0.0
    %615 = vmatprep.subr.mxu0 0.0
    %616 = vmatpush1.msra.mxu0 0.0
    %617 = vmatprep.subr.mxu0 0.0
    %618 = vmatpush1.msra.mxu0 0.0
    %619 = vmatprep.subr.mxu0 0.0
    %620 = vmatpush1.msra.mxu0 0.0
    %621 = vmatprep.subr.mxu0 0.0
    %622 = vmatpush1.msra.mxu0 0.0
    %623 = vmatprep.subr.mxu0 0.0
    %624 = vmatpush1.msra.mxu0 0.0
    %625 = vmatprep.subr.mxu0 0.0
    %626 = vmatpush1.msra.mxu0 0.0
    %627 = vmatprep.subr.mxu0 0.0
    %628 = vmatpush1.msra.mxu0 0.0
    %629 = vmatprep.subr.mxu0 0.0
    %630 = vmatpush1.msra.mxu0 0.0
    %631 = vmatprep.subr.mxu0 0.0
    %632 = vmatpush1.msra.mxu0 0.0
    %633 = vmatprep.subr.mxu0 0.0
    %634 = vmatpush1.msra.mxu0 0.0
    %635 = vmatprep.subr.mxu0 0.0
    %636 = vmatpush1.msra.mxu0 0.0
    %637 = vmatprep.subr.mxu0 0.0
    %638 = vmatpush1.msra.mxu0 0.0
    %639 = vmatprep.mubr.f32.mxu0 0.0
    %640 = vmatmul.mubr.f32.gmra.mrb[0].mxu0 %v564
    %v641 = vpop.f32.mrb[0].mxu0
    %v642 = vadd.f32 %v546, %v641
    %v643 = vpop.f32.mrb[0].mxu0
    %644 = vmatprep.mubr.f32.mxu0 0.0
    %645 = vmatmul.mubr.f32.gmra.mrb[0].mxu0 %v567
    %v646 = vpop.f32.mrb[0].mxu0
    %v647 = vadd.f32 %v551, %v646
    %v648 = vpop.f32.mrb[0].mxu0
    %649 = vmatprep.mubr.f32.mxu0 0.0
    %650 = vmatmul.mubr.f32.gmra.mrb[0].mxu0 %v570
    %v651 = vpop.f32.mrb[0].mxu0
    %v652 = vadd.f32 %v556, %v651
    %v653 = vpop.f32.mrb[0].mxu0
    %654 = vmatprep.mubr.f32.mxu0 0.0
    %655 = vmatmul.mubr.f32.gmra.mrb[0].mxu0 %v573
    %v656 = vpop.f32.mrb[0].mxu0
    %v657 = vadd.f32 %v561, %v656
    %v658 = vpop.f32.mrb[0].mxu0
    %659 = vdwg.mxu0
    %v660 = vmax.f32 %v642, 0.0
    %v661 = vmax.f32 %v647, 0.0
    %v662 = vmax.f32 %v652, 0.0
    %v663 = vmax.f32 %v657, 0.0
    %v664 = vld [vmem:[%s9] sm:$0xff]
    %v665 = vld [vmem:[%s9 + $0x8] sm:$0xff]
    %v666 = vld [vmem:[%s9 + $0x10] sm:$0xff]
    %v667 = vld [vmem:[%s9 + $0x18] sm:$0xff]
    %669 = vset.pattern.permute.xlu0 0
    %670 = vperm.xlu0 %669, %v664
    %v671 = vpop.permute.xlu0 %670
    %674 = vset.pattern.permute.xlu0 0
    %675 = vperm.xlu0 %674, %v665
    %v676 = vpop.permute.xlu0 %675
    %679 = vset.pattern.permute.xlu0 0
    %680 = vperm.xlu0 %679, %v666
    %v681 = vpop.permute.xlu0 %680
    %684 = vset.pattern.permute.xlu0 0
    %685 = vperm.xlu0 %684, %v667
    %v686 = vpop.permute.xlu0 %685
    %v688 = vmul.f32 %v660, %v671
    %v689 = vmul.f32 %v661, %v676
    %v690 = vmul.f32 %v662, %v681
    %v691 = vmul.f32 %v663, %v686
    %v692 = vadd.f32 %v688, %v689
    %v693 = vadd.f32 %v692, %v690
    %v694 = vadd.f32 %v693, %v691
    %v695 = vrot.slane %v694, 4
    %v696 = vadd.f32 %v694, %v695
    %v697 = vrot.slane %v696, 2
    %v698 = vadd.f32 %v696, %v697
    %v699 = vrot.slane %v698, 1
    %v700 = vadd.f32 %v698, %v699
    %v701 = vld [vmem:[#allocation2] sm:$0x1]
    %703 = vset.pattern.permute.xlu0 0
    %704 = vperm.xlu0 %703, %v701
    %v705 = vpop.permute.xlu0 %704
    %v707 = vlaneseq
    %v708 = vshrl.u32 %v707, 7
    %v709 = vsub.s32 0, %v708
    %v710 = vrot.slane %v705, %v709
    %v711 = vadd.f32 %v700, %v710
    %712 = vst [vmem:[#allocation3] sm:$0x1] %v711
    // Predicated region
    $region46: #{tpu_custom_call.1} parent=1 // pred_check
      _
    $region47: #{tpu_custom_call.1} parent=1 // pred_check_branch
      %714 = sbr.rel (0) target = $region49
    $region48: #{tpu_custom_call.1} parent=1 // pred_region
      %s716 = ssub.s32 16, 16
      %717 = vsyncadd [#allocation4], %s716
      %s719 = sshll.u32 [#allocation3], 4
      %s720 = int_to_ptr.vmem [resolvable:$true] %s719
      %722 = dma.vmem_to_hbm [thread:$0]  %s720, 16, %s11, [#allocation4]
    $region49: #{tpu_custom_call.1} parent=1 // pred_fallthru
      _
    // Predicated region
    $region50: #{tpu_custom_call.1} parent=1 // pred_check
      _
    $region51: #{tpu_custom_call.1} parent=1 // pred_check_branch
      %724 = sbr.rel (0) target = $region53
    $region52: #{tpu_custom_call.1} parent=1 // pred_region
      %725 = dma.done [#allocation4], 16
    $region53: #{tpu_custom_call.1} parent=1 // pred_fallthru
      _
    %726 = vsyncpa [#allocation4], 1

</llo_original>
